<compile_context>
chip_gen: v5e
topology: v5e:2x2
jax: 0.10.0
libtpu: 0.0.40
codegen_flags: <defaults>
</compile_context>

<pallas_src>
import functools

import jax
import jax.numpy as jnp
from jax.experimental import pallas as pl
from jax.experimental.pallas import tpu as pltpu

EPS = 1e-5     # nn.BatchNorm2d default eps
LANE = 128


def _round_up(x, m):
    return (x + m - 1) // m * m


def _deconv_kernel(slab_ref, w_ref, b_ref, conv_ref, stats_ref, *,
                   tr, w_out, h_valid, mask_tail):
    """One (row-block j, image n) grid step.

    slab_ref : (TR+2, W+2, Cin)  zero-padded input rows j*TR .. j*TR+TR+1
    w_ref    : (9, Cin, Cp)      3x3 sub-pixel tap weights, 4 phases packed in Cp
    b_ref    : (1, Cp)           ConvTranspose2d bias tiled per phase (f32)
    conv_ref : (TR*W, Cp)        conv + bias, rows = (q_local, p) raster
    stats_ref: (2, Cp)           row 0 = per-column sum, row 1 = sum of squares
    """
    cp = conv_ref.shape[1]

    @pl.loop(0, tr)
    def _(g):                                             # one pre-upsample row
        acc = jnp.zeros((w_out, cp), jnp.float32)
        for t in range(9):                                # 3x3 sub-pixel taps
            dy, dx = t // 3, t % 3
            lhs = slab_ref[g + dy, pl.ds(dx, w_out), :]   # (W, Cin)
            acc = acc + jnp.dot(lhs, w_ref[t],
                                preferred_element_type=jnp.float32)
        acc = acc + b_ref[...]                            # (1, Cp) broadcast
        conv_ref[pl.ds(g * w_out, w_out), :] = acc.astype(conv_ref.dtype)

    # BN partial statistics over this tile (VMEM read-back, no extra HBM pass).
    conv = conv_ref[...].astype(jnp.float32)
    if mask_tail:  # trace-time gate: only emitted when H % TR != 0
        j = pl.program_id(0)
        nvalid = jnp.minimum(h_valid - j * tr, tr) * w_out
        rows = jax.lax.broadcasted_iota(jnp.int32, conv.shape, 0)
        conv = jnp.where(rows < nvalid, conv, 0.0)
    stats_ref[0:1, :] = jnp.sum(conv, axis=0, keepdims=True)
    stats_ref[1:2, :] = jnp.sum(conv * conv, axis=0, keepdims=True)


def upsample2x_block(x_nchw, w_t, b, gamma, beta, *,
                     tile_rows=1024, compute_dtype=jnp.float32):
    """Forward of Upsample2xBlock(in_size, out_size, upsample='deconv').

    x_nchw : (N, Cin, H, W)     float32, NCHW (PyTorch convention)
    w_t    : (Cin, Cout, 4, 4)  ConvTranspose2d weight (PyTorch layout)
    b      : (Cout,)            ConvTranspose2d bias
    gamma  : (Cout,)            BatchNorm2d weight
    beta   : (Cout,)            BatchNorm2d bias
    returns: (N, Cout, 2H, 2W)  NCHW

    tile_rows    : target output-center rows per grid step (TR = tile_rows // W).
    compute_dtype: dtype of the MXU operands (use jnp.bfloat16 in production to
                   halve input/intermediate HBM bytes; accumulation stays f32).
    """
    S = 2
    N, Cin, H, W = x_nchw.shape
    Cout = w_t.shape[1]
    f32 = jnp.float32

    # ---- row-block tiling --------------------------------------------------
    TR = tile_rows // W if W > 0 else 1
    TR = max(2, min(TR, H)) if H >= 2 else 2
    num_rb = pl.cdiv(H, TR)
    Hp = num_rb * TR
    C4 = 4 * Cout
    Cp = _round_up(C4, LANE)

    # ---- zero-padded NHWC input and overlapping row-block slabs ------------
    # slabs[n, j] = padded rows [j*TR, j*TR + TR + 2) of image n (halo of 1 on
    # every side).  ~(1 + 2/TR)x the input bytes; the big im2col is gone.
    x = jnp.transpose(x_nchw, (0, 2, 3, 1)).astype(f32)           # (N,H,W,Cin)
    xpad = jnp.pad(x, ((0, 0), (1, Hp - H + 1), (1, 1), (0, 0)))  # (N,Hp+2,W+2,Cin)
    xpad = xpad.astype(compute_dtype)
    if TR > 2:  # extra zero rows so the halo reshape below stays in bounds
        xpad = jnp.pad(xpad, ((0, 0), (0, TR - 2), (0, 0), (0, 0)))
    main = xpad[:, :Hp].reshape(N, num_rb, TR, W + 2, Cin)
    halo = xpad[:, TR:TR + Hp].reshape(N, num_rb, TR, W + 2, Cin)[:, :, :2]
    slabs = jnp.concatenate([main, halo], axis=2)     # (N, num_rb, TR+2, W+2, Cin)

    # ---- pack the 4 sub-pixel phases of ConvTranspose2d(k=4,s=2,p=1) -------
    #   out[n, 2q+ry, 2p+rx, co] = sum_{a,b in {0,1}, ci}
    #       xpad[n, q+ry+a, p+rx+b, ci] * W[ci, co, KY[ry][a], KX[rx][b]]
    # Tap (dy, dx) = (ry+a, rx+b) of a 3x3 stencil; phase columns ph*Cout+co.
    KY = ((3, 1), (2, 0))
    KX = ((3, 1), (2, 0))
    w9 = jnp.zeros((9, Cin, Cp), f32)
    for ry in (0, 1):
        for rx in (0, 1):
            ph = 2 * ry + rx
            for a in (0, 1):
                for bb in (0, 1):
                    dy, dx = ry + a, rx + bb
                    w9 = w9.at[3 * dy + dx, :, ph * Cout:(ph + 1) * Cout].set(
                        w_t[:, :, KY[ry][a], KX[rx][bb]].astype(f32))
    w9 = w9.astype(compute_dtype)
    b4 = jnp.zeros((1, Cp), f32).at[0, :C4].set(jnp.tile(b.astype(f32), 4))

    # ---- single Pallas pass: conv + bias + BN partial stats ----------------
    kernel = functools.partial(_deconv_kernel, tr=TR, w_out=W, h_valid=H,
                               mask_tail=(Hp != H))
    cparams = pltpu.CompilerParams(
        dimension_semantics=("parallel", "parallel"),
        vmem_limit_bytes=48 * 1024 * 1024)   # <= v7x 64 MiB; ample on v5e/v6e

    conv_buf, stats = pl.pallas_call(
        kernel,
        out_shape=(
            jax.ShapeDtypeStruct((N, num_rb, TR * W, Cp), compute_dtype),
            jax.ShapeDtypeStruct((N, num_rb, 2, Cp), f32),
        ),
        grid=(num_rb, N),
        in_specs=[
            pl.BlockSpec((None, None, TR + 2, W + 2, Cin),
                         lambda j, n: (n, j, 0, 0, 0)),
            pl.BlockSpec((9, Cin, Cp), lambda j, n: (0, 0, 0)),
            pl.BlockSpec((1, Cp), lambda j, n: (0, 0)),
        ],
        out_specs=(
            pl.BlockSpec((None, None, TR * W, Cp), lambda j, n: (n, j, 0, 0)),
            pl.BlockSpec((None, None, 2, Cp), lambda j, n: (n, j, 0, 0)),
        ),
        compiler_params=cparams,
    )(slabs, w9, b4)

    # ---- finalize BatchNorm2d training-mode statistics (tiny, XLA) ---------
    # NOTE: single-pass E[x^2]-E[x]^2 in f32; fine at these magnitudes/tols.
    cnt = 4.0 * N * H * W
    col_sum = jnp.sum(stats[:, :, 0, :C4], axis=(0, 1)).reshape(4, Cout)
    col_sq = jnp.sum(stats[:, :, 1, :C4], axis=(0, 1)).reshape(4, Cout)
    mean = jnp.sum(col_sum, axis=0) / cnt
    var = jnp.maximum(jnp.sum(col_sq, axis=0) / cnt - mean * mean, 0.0)
    inv_std = jax.lax.rsqrt(var + EPS)
    scale = gamma.astype(f32) * inv_std                       # (Cout,)
    shift = beta.astype(f32) - mean * scale                   # (Cout,)

    # ---- folded BN affine + ReLU, fused by XLA into the phase interleave ---
    conv = conv_buf.reshape(N, Hp, W, Cp)[:, :H, :, :C4].astype(f32)
    conv = conv.reshape(N, H, W, 2, 2, Cout)                  # (.., ry, rx, co)
    y = jnp.maximum(conv * scale + shift, 0.0)
    y = jnp.transpose(y, (0, 5, 1, 3, 2, 4))                  # (N,Cout,H,ry,W,rx)
    return y.reshape(N, Cout, S * H, S * W)
    # TODO(synk): BatchNorm2d running_mean/running_var buffer updates are not
    # modeled (training-mode batch-statistics forward only).


def _reference(x_nchw, w_t, b, gamma, beta):
    """Pure-JAX reference: direct ConvTranspose2d scatter + BN(train) + ReLU."""
    K, S, P = 4, 2, 1
    N, Cin, H, W = x_nchw.shape
    Cout = w_t.shape[1]
    x = jnp.transpose(x_nchw, (0, 2, 3, 1)).astype(jnp.float32)
    full = jnp.zeros((N, S * H + 2, S * W + 2, Cout), jnp.float32)
    for ky in range(K):
        for kx in range(K):
            contrib = jnp.einsum('nhwc,cd->nhwd', x, w_t[:, :, ky, kx])
            full = full.at[:, ky:ky + S * H:S, kx:kx + S * W:S, :].add(contrib)
    conv = full[:, P:P + S * H, P:P + S * W, :] + b
    mean = jnp.mean(conv, axis=(0, 1, 2), keepdims=True)
    var = jnp.mean((conv - mean) ** 2, axis=(0, 1, 2), keepdims=True)
    y = (conv - mean) * jax.lax.rsqrt(var + EPS) * gamma + beta
    y = jnp.maximum(y, 0.0)
    return jnp.transpose(y, (0, 3, 1, 2))


if __name__ == "__main__":
    key = jax.random.PRNGKey(0)
    k_w, k_b, k_x = jax.random.split(key, 3)

    N, Cin, Cout, H, W, K = 2, 4, 4, 16, 16, 4

    # Deterministic synthetic parameter init (uniform, PyTorch-style bound).
    bound = 1.0 / (Cin * K * K) ** 0.5
    w_t = jax.random.uniform(k_w, (Cin, Cout, K, K), jnp.float32, -bound, bound)
    b = jax.random.uniform(k_b, (Cout,), jnp.float32, -bound, bound)
    gamma = jnp.ones((Cout,), jnp.float32)   # BatchNorm2d default init
    beta = jnp.zeros((Cout,), jnp.float32)

    x = jax.random.normal(k_x, (N, Cin, H, W), jnp.float32)

    ref = jax.block_until_ready(_reference(x, w_t, b, gamma, beta))

    # Default tiling (single row-block per image at this toy size), f32 operands.
    out = jax.block_until_ready(upsample2x_block(x, w_t, b, gamma, beta))
    assert out.shape == (N, Cout, 2 * H, 2 * W), out.shape
    assert jnp.allclose(out, ref, rtol=1e-4, atol=1e-4), \
        float(jnp.max(jnp.abs(out - ref)))

    # Small tiles: exercises the multi-row-block grid and the BN tail-row mask.
    out2 = jax.block_until_ready(
        upsample2x_block(x, w_t, b, gamma, beta, tile_rows=96))
    assert jnp.allclose(out2, ref, rtol=1e-4, atol=1e-4), \
        float(jnp.max(jnp.abs(out2 - ref)))

    # bfloat16 MXU operands (production option): looser tolerance.
    out3 = jax.block_until_ready(
        upsample2x_block(x, w_t, b, gamma, beta, compute_dtype=jnp.bfloat16))
    assert float(jnp.max(jnp.abs(out3 - ref))) < 3e-2, \
        float(jnp.max(jnp.abs(out3 - ref)))

    print("KERNEL_OK")
</pallas_src>

<mosaic_0001>
module attributes {stable_mosaic.version = 11 : i64} {
  func.func @_deconv_kernel(%arg0: i32, %arg1: i32, %arg2: memref<1x1x18x18x4xf32, #tpu.memory_space<vmem>>, %arg3: memref<9x4x128xf32, #tpu.memory_space<vmem>>, %arg4: memref<1x128xf32, #tpu.memory_space<vmem>>, %arg5: memref<1x1x256x128xf32, #tpu.memory_space<vmem>>, %arg6: memref<1x1x2x128xf32, #tpu.memory_space<vmem>>) attributes {dimension_semantics = [#tpu.dimension_semantics<parallel>, #tpu.dimension_semantics<parallel>], iteration_bounds = array<i64: 1, 2>, scalar_prefetch = 0 : i64, scratch_operands = 0 : i64, tpu.core_type = #tpu.core_type<tc>, window_params = [{transform_indices = @transform_0, window_bounds = array<i64: 1, 1, 18, 18, 4>}, {pipeline_mode = #tpu.pipeline_mode<synchronous>, transform_indices = @transform_1, window_bounds = array<i64: 9, 4, 128>}, {pipeline_mode = #tpu.pipeline_mode<synchronous>, transform_indices = @transform_2, window_bounds = array<i64: 1, 128>}, {transform_indices = @transform_3, window_bounds = array<i64: 1, 1, 256, 128>}, {transform_indices = @transform_4, window_bounds = array<i64: 1, 1, 2, 128>}]} {
    %c0_i32 = arith.constant 0 : i32
    %c16_i32 = arith.constant 16 : i32
    %0 = arith.addi %c0_i32, %c16_i32 : i32
    %c1_i32 = arith.constant 1 : i32
    scf.for %arg7 = %c0_i32 to %0 step %c1_i32  : i32 {
      %c1_i32_12 = arith.constant 1 : i32
      %14 = arith.muli %arg7, %c1_i32_12 : i32
      %c0_i32_13 = arith.constant 0 : i32
      %15 = arith.addi %c0_i32_13, %14 : i32
      %cst_14 = arith.constant 0.000000e+00 : f32
      %16 = vector.broadcast %cst_14 : f32 to vector<16x128xf32>
      %c0_i32_15 = arith.constant 0 : i32
      %17 = arith.addi %15, %c0_i32_15 : i32
      %c0_16 = arith.constant 0 : index
      %c0_17 = arith.constant 0 : index
      %18 = arith.index_cast %17 : i32 to index
      %c0_18 = arith.constant 0 : index
      %c0_19 = arith.constant 0 : index
      %19 = vector.load %arg2[%c0_16, %c0_17, %18, %c0_18, %c0_19] : memref<1x1x18x18x4xf32, #tpu.memory_space<vmem>>, vector<1x1x1x16x4xf32>
      %20 = vector.shape_cast %19 : vector<1x1x1x16x4xf32> to vector<16x4xf32>
      %c0_20 = arith.constant 0 : index
      %c0_21 = arith.constant 0 : index
      %c0_22 = arith.constant 0 : index
      %21 = vector.load %arg3[%c0_20, %c0_21, %c0_22] : memref<9x4x128xf32, #tpu.memory_space<vmem>>, vector<1x4x128xf32>
      %22 = vector.shape_cast %21 : vector<1x4x128xf32> to vector<4x128xf32>
      %cst_23 = arith.constant dense<0.000000e+00> : vector<16x128xf32>
      %23 = tpu.matmul %20, %22, %cst_23 {dimension_numbers = #tpu.dot_dimension_numbers<[1], [0], [0], [1], [0, 0, 1, 1], [], []>} : vector<16x4xf32>, vector<4x128xf32>, vector<16x128xf32> -> vector<16x128xf32>
      %24 = arith.addf %16, %23 : vector<16x128xf32>
      %c0_i32_24 = arith.constant 0 : i32
      %25 = arith.addi %15, %c0_i32_24 : i32
      %c0_25 = arith.constant 0 : index
      %c0_26 = arith.constant 0 : index
      %26 = arith.index_cast %25 : i32 to index
      %c1_27 = arith.constant 1 : index
      %c0_28 = arith.constant 0 : index
      %27 = vector.load %arg2[%c0_25, %c0_26, %26, %c1_27, %c0_28] : memref<1x1x18x18x4xf32, #tpu.memory_space<vmem>>, vector<1x1x1x16x4xf32>
      %28 = vector.shape_cast %27 : vector<1x1x1x16x4xf32> to vector<16x4xf32>
      %c1_29 = arith.constant 1 : index
      %c0_30 = arith.constant 0 : index
      %c0_31 = arith.constant 0 : index
      %29 = vector.load %arg3[%c1_29, %c0_30, %c0_31] : memref<9x4x128xf32, #tpu.memory_space<vmem>>, vector<1x4x128xf32>
      %30 = vector.shape_cast %29 : vector<1x4x128xf32> to vector<4x128xf32>
      %cst_32 = arith.constant dense<0.000000e+00> : vector<16x128xf32>
      %31 = tpu.matmul %28, %30, %cst_32 {dimension_numbers = #tpu.dot_dimension_numbers<[1], [0], [0], [1], [0, 0, 1, 1], [], []>} : vector<16x4xf32>, vector<4x128xf32>, vector<16x128xf32> -> vector<16x128xf32>
      %32 = arith.addf %24, %31 : vector<16x128xf32>
      %c0_i32_33 = arith.constant 0 : i32
      %33 = arith.addi %15, %c0_i32_33 : i32
      %c0_34 = arith.constant 0 : index
      %c0_35 = arith.constant 0 : index
      %34 = arith.index_cast %33 : i32 to index
      %c2 = arith.constant 2 : index
      %c0_36 = arith.constant 0 : index
      %35 = vector.load %arg2[%c0_34, %c0_35, %34, %c2, %c0_36] : memref<1x1x18x18x4xf32, #tpu.memory_space<vmem>>, vector<1x1x1x16x4xf32>
      %36 = vector.shape_cast %35 : vector<1x1x1x16x4xf32> to vector<16x4xf32>
      %c2_37 = arith.constant 2 : index
      %c0_38 = arith.constant 0 : index
      %c0_39 = arith.constant 0 : index
      %37 = vector.load %arg3[%c2_37, %c0_38, %c0_39] : memref<9x4x128xf32, #tpu.memory_space<vmem>>, vector<1x4x128xf32>
      %38 = vector.shape_cast %37 : vector<1x4x128xf32> to vector<4x128xf32>
      %cst_40 = arith.constant dense<0.000000e+00> : vector<16x128xf32>
      %39 = tpu.matmul %36, %38, %cst_40 {dimension_numbers = #tpu.dot_dimension_numbers<[1], [0], [0], [1], [0, 0, 1, 1], [], []>} : vector<16x4xf32>, vector<4x128xf32>, vector<16x128xf32> -> vector<16x128xf32>
      %40 = arith.addf %32, %39 : vector<16x128xf32>
      %c1_i32_41 = arith.constant 1 : i32
      %41 = arith.addi %15, %c1_i32_41 : i32
      %c0_42 = arith.constant 0 : index
      %c0_43 = arith.constant 0 : index
      %42 = arith.index_cast %41 : i32 to index
      %c0_44 = arith.constant 0 : index
      %c0_45 = arith.constant 0 : index
      %43 = vector.load %arg2[%c0_42, %c0_43, %42, %c0_44, %c0_45] : memref<1x1x18x18x4xf32, #tpu.memory_space<vmem>>, vector<1x1x1x16x4xf32>
      %44 = vector.shape_cast %43 : vector<1x1x1x16x4xf32> to vector<16x4xf32>
      %c3 = arith.constant 3 : index
      %c0_46 = arith.constant 0 : index
      %c0_47 = arith.constant 0 : index
      %45 = vector.load %arg3[%c3, %c0_46, %c0_47] : memref<9x4x128xf32, #tpu.memory_space<vmem>>, vector<1x4x128xf32>
      %46 = vector.shape_cast %45 : vector<1x4x128xf32> to vector<4x128xf32>
      %cst_48 = arith.constant dense<0.000000e+00> : vector<16x128xf32>
      %47 = tpu.matmul %44, %46, %cst_48 {dimension_numbers = #tpu.dot_dimension_numbers<[1], [0], [0], [1], [0, 0, 1, 1], [], []>} : vector<16x4xf32>, vector<4x128xf32>, vector<16x128xf32> -> vector<16x128xf32>
      %48 = arith.addf %40, %47 : vector<16x128xf32>
      %c1_i32_49 = arith.constant 1 : i32
      %49 = arith.addi %15, %c1_i32_49 : i32
      %c0_50 = arith.constant 0 : index
      %c0_51 = arith.constant 0 : index
      %50 = arith.index_cast %49 : i32 to index
      %c1_52 = arith.constant 1 : index
      %c0_53 = arith.constant 0 : index
      %51 = vector.load %arg2[%c0_50, %c0_51, %50, %c1_52, %c0_53] : memref<1x1x18x18x4xf32, #tpu.memory_space<vmem>>, vector<1x1x1x16x4xf32>
      %52 = vector.shape_cast %51 : vector<1x1x1x16x4xf32> to vector<16x4xf32>
      %c4 = arith.constant 4 : index
      %c0_54 = arith.constant 0 : index
      %c0_55 = arith.constant 0 : index
      %53 = vector.load %arg3[%c4, %c0_54, %c0_55] : memref<9x4x128xf32, #tpu.memory_space<vmem>>, vector<1x4x128xf32>
      %54 = vector.shape_cast %53 : vector<1x4x128xf32> to vector<4x128xf32>
      %cst_56 = arith.constant dense<0.000000e+00> : vector<16x128xf32>
      %55 = tpu.matmul %52, %54, %cst_56 {dimension_numbers = #tpu.dot_dimension_numbers<[1], [0], [0], [1], [0, 0, 1, 1], [], []>} : vector<16x4xf32>, vector<4x128xf32>, vector<16x128xf32> -> vector<16x128xf32>
      %56 = arith.addf %48, %55 : vector<16x128xf32>
      %c1_i32_57 = arith.constant 1 : i32
      %57 = arith.addi %15, %c1_i32_57 : i32
      %c0_58 = arith.constant 0 : index
      %c0_59 = arith.constant 0 : index
      %58 = arith.index_cast %57 : i32 to index
      %c2_60 = arith.constant 2 : index
      %c0_61 = arith.constant 0 : index
      %59 = vector.load %arg2[%c0_58, %c0_59, %58, %c2_60, %c0_61] : memref<1x1x18x18x4xf32, #tpu.memory_space<vmem>>, vector<1x1x1x16x4xf32>
      %60 = vector.shape_cast %59 : vector<1x1x1x16x4xf32> to vector<16x4xf32>
      %c5 = arith.constant 5 : index
      %c0_62 = arith.constant 0 : index
      %c0_63 = arith.constant 0 : index
      %61 = vector.load %arg3[%c5, %c0_62, %c0_63] : memref<9x4x128xf32, #tpu.memory_space<vmem>>, vector<1x4x128xf32>
      %62 = vector.shape_cast %61 : vector<1x4x128xf32> to vector<4x128xf32>
      %cst_64 = arith.constant dense<0.000000e+00> : vector<16x128xf32>
      %63 = tpu.matmul %60, %62, %cst_64 {dimension_numbers = #tpu.dot_dimension_numbers<[1], [0], [0], [1], [0, 0, 1, 1], [], []>} : vector<16x4xf32>, vector<4x128xf32>, vector<16x128xf32> -> vector<16x128xf32>
      %64 = arith.addf %56, %63 : vector<16x128xf32>
      %c2_i32 = arith.constant 2 : i32
      %65 = arith.addi %15, %c2_i32 : i32
      %c0_65 = arith.constant 0 : index
      %c0_66 = arith.constant 0 : index
      %66 = arith.index_cast %65 : i32 to index
      %c0_67 = arith.constant 0 : index
      %c0_68 = arith.constant 0 : index
      %67 = vector.load %arg2[%c0_65, %c0_66, %66, %c0_67, %c0_68] : memref<1x1x18x18x4xf32, #tpu.memory_space<vmem>>, vector<1x1x1x16x4xf32>
      %68 = vector.shape_cast %67 : vector<1x1x1x16x4xf32> to vector<16x4xf32>
      %c6 = arith.constant 6 : index
      %c0_69 = arith.constant 0 : index
      %c0_70 = arith.constant 0 : index
      %69 = vector.load %arg3[%c6, %c0_69, %c0_70] : memref<9x4x128xf32, #tpu.memory_space<vmem>>, vector<1x4x128xf32>
      %70 = vector.shape_cast %69 : vector<1x4x128xf32> to vector<4x128xf32>
      %cst_71 = arith.constant dense<0.000000e+00> : vector<16x128xf32>
      %71 = tpu.matmul %68, %70, %cst_71 {dimension_numbers = #tpu.dot_dimension_numbers<[1], [0], [0], [1], [0, 0, 1, 1], [], []>} : vector<16x4xf32>, vector<4x128xf32>, vector<16x128xf32> -> vector<16x128xf32>
      %72 = arith.addf %64, %71 : vector<16x128xf32>
      %c2_i32_72 = arith.constant 2 : i32
      %73 = arith.addi %15, %c2_i32_72 : i32
      %c0_73 = arith.constant 0 : index
      %c0_74 = arith.constant 0 : index
      %74 = arith.index_cast %73 : i32 to index
      %c1_75 = arith.constant 1 : index
      %c0_76 = arith.constant 0 : index
      %75 = vector.load %arg2[%c0_73, %c0_74, %74, %c1_75, %c0_76] : memref<1x1x18x18x4xf32, #tpu.memory_space<vmem>>, vector<1x1x1x16x4xf32>
      %76 = vector.shape_cast %75 : vector<1x1x1x16x4xf32> to vector<16x4xf32>
      %c7 = arith.constant 7 : index
      %c0_77 = arith.constant 0 : index
      %c0_78 = arith.constant 0 : index
      %77 = vector.load %arg3[%c7, %c0_77, %c0_78] : memref<9x4x128xf32, #tpu.memory_space<vmem>>, vector<1x4x128xf32>
      %78 = vector.shape_cast %77 : vector<1x4x128xf32> to vector<4x128xf32>
      %cst_79 = arith.constant dense<0.000000e+00> : vector<16x128xf32>
      %79 = tpu.matmul %76, %78, %cst_79 {dimension_numbers = #tpu.dot_dimension_numbers<[1], [0], [0], [1], [0, 0, 1, 1], [], []>} : vector<16x4xf32>, vector<4x128xf32>, vector<16x128xf32> -> vector<16x128xf32>
      %80 = arith.addf %72, %79 : vector<16x128xf32>
      %c2_i32_80 = arith.constant 2 : i32
      %81 = arith.addi %15, %c2_i32_80 : i32
      %c0_81 = arith.constant 0 : index
      %c0_82 = arith.constant 0 : index
      %82 = arith.index_cast %81 : i32 to index
      %c2_83 = arith.constant 2 : index
      %c0_84 = arith.constant 0 : index
      %83 = vector.load %arg2[%c0_81, %c0_82, %82, %c2_83, %c0_84] : memref<1x1x18x18x4xf32, #tpu.memory_space<vmem>>, vector<1x1x1x16x4xf32>
      %84 = vector.shape_cast %83 : vector<1x1x1x16x4xf32> to vector<16x4xf32>
      %c8 = arith.constant 8 : index
      %c0_85 = arith.constant 0 : index
      %c0_86 = arith.constant 0 : index
      %85 = vector.load %arg3[%c8, %c0_85, %c0_86] : memref<9x4x128xf32, #tpu.memory_space<vmem>>, vector<1x4x128xf32>
      %86 = vector.shape_cast %85 : vector<1x4x128xf32> to vector<4x128xf32>
      %cst_87 = arith.constant dense<0.000000e+00> : vector<16x128xf32>
      %87 = tpu.matmul %84, %86, %cst_87 {dimension_numbers = #tpu.dot_dimension_numbers<[1], [0], [0], [1], [0, 0, 1, 1], [], []>} : vector<16x4xf32>, vector<4x128xf32>, vector<16x128xf32> -> vector<16x128xf32>
      %88 = arith.addf %80, %87 : vector<16x128xf32>
      %c0_88 = arith.constant 0 : index
      %c0_89 = arith.constant 0 : index
      %89 = vector.load %arg4[%c0_88, %c0_89] : memref<1x128xf32, #tpu.memory_space<vmem>>, vector<1x128xf32>
      %90 = vector.broadcast %89 : vector<1x128xf32> to vector<16x128xf32>
      %91 = arith.addf %88, %90 : vector<16x128xf32>
      %c16_i32_90 = arith.constant 16 : i32
      %92 = arith.muli %15, %c16_i32_90 : i32
      %c0_91 = arith.constant 0 : index
      %c0_92 = arith.constant 0 : index
      %93 = arith.index_cast %92 : i32 to index
      %c0_93 = arith.constant 0 : index
      %94 = vector.load %arg5[%c0_91, %c0_92, %93, %c0_93] : memref<1x1x256x128xf32, #tpu.memory_space<vmem>>, vector<1x1x16x128xf32>
      %95 = vector.shape_cast %94 : vector<1x1x16x128xf32> to vector<16x128xf32>
      %96 = vector.shape_cast %91 : vector<16x128xf32> to vector<1x1x16x128xf32>
      tpu.vector_store %arg5[%c0_91, %c0_92, %93, %c0_93], %96 {strides = array<i32>} : memref<1x1x256x128xf32, #tpu.memory_space<vmem>>, vector<1x1x16x128xf32>,
    }
    %c16_i32_0 = arith.constant 16 : i32
    %c0 = arith.constant 0 : index
    %c0_1 = arith.constant 0 : index
    %c0_2 = arith.constant 0 : index
    %c0_3 = arith.constant 0 : index
    %1 = vector.load %arg5[%c0, %c0_1, %c0_2, %c0_3] : memref<1x1x256x128xf32, #tpu.memory_space<vmem>>, vector<1x1x256x128xf32>
    %2 = vector.shape_cast %1 : vector<1x1x256x128xf32> to vector<256x128xf32>
    %cst = arith.constant dense<0.000000e+00> : vector<128xf32>
    %3 = vector.multi_reduction <add>, %2, %cst [0] : vector<256x128xf32> to vector<128xf32>
    %4 = vector.shape_cast %3 : vector<128xf32> to vector<1x128xf32>
    %c0_4 = arith.constant 0 : index
    %c0_5 = arith.constant 0 : index
    %c0_6 = arith.constant 0 : index
    %c0_7 = arith.constant 0 : index
    %5 = vector.load %arg6[%c0_4, %c0_5, %c0_6, %c0_7] : memref<1x1x2x128xf32, #tpu.memory_space<vmem>>, vector<1x1x1x128xf32>
    %6 = vector.shape_cast %5 : vector<1x1x1x128xf32> to vector<1x128xf32>
    %7 = vector.shape_cast %4 : vector<1x128xf32> to vector<1x1x1x128xf32>
    tpu.vector_store %arg6[%c0_4, %c0_5, %c0_6, %c0_7], %7 {strides = array<i32>} : memref<1x1x2x128xf32, #tpu.memory_space<vmem>>, vector<1x1x1x128xf32>,
    %8 = arith.mulf %2, %2 : vector<256x128xf32>
    %cst_8 = arith.constant dense<0.000000e+00> : vector<128xf32>
    %9 = vector.multi_reduction <add>, %8, %cst_8 [0] : vector<256x128xf32> to vector<128xf32>
    %10 = vector.shape_cast %9 : vector<128xf32> to vector<1x128xf32>
    %c0_9 = arith.constant 0 : index
    %c0_10 = arith.constant 0 : index
    %c1 = arith.constant 1 : index
    %c0_11 = arith.constant 0 : index
    %11 = vector.load %arg6[%c0_9, %c0_10, %c1, %c0_11] : memref<1x1x2x128xf32, #tpu.memory_space<vmem>>, vector<1x1x1x128xf32>
    %12 = vector.shape_cast %11 : vector<1x1x1x128xf32> to vector<1x128xf32>
    %13 = vector.shape_cast %10 : vector<1x128xf32> to vector<1x1x1x128xf32>
    tpu.vector_store %arg6[%c0_9, %c0_10, %c1, %c0_11], %13 {strides = array<i32>} : memref<1x1x2x128xf32, #tpu.memory_space<vmem>>, vector<1x1x1x128xf32>,
    return
  }
  func.func @transform_0(%arg0: i32, %arg1: i32) -> (i32, i32, i32, i32, i32) {
    %c0_i32 = arith.constant 0 : i32
    %c0_i32_0 = arith.constant 0 : i32
    %c0_i32_1 = arith.constant 0 : i32
    %c0_i32_2 = arith.constant 0 : i32
    return %arg1, %arg0, %c0_i32, %c0_i32_0, %c0_i32_1 : i32, i32, i32, i32, i32
  }
  func.func @transform_1(%arg0: i32, %arg1: i32) -> (i32, i32, i32) {
    %c0_i32 = arith.constant 0 : i32
    %c0_i32_0 = arith.constant 0 : i32
    %c0_i32_1 = arith.constant 0 : i32
    %c0_i32_2 = arith.constant 0 : i32
    return %c0_i32, %c0_i32_0, %c0_i32_1 : i32, i32, i32
  }
  func.func @transform_2(%arg0: i32, %arg1: i32) -> (i32, i32) {
    %c0_i32 = arith.constant 0 : i32
    %c0_i32_0 = arith.constant 0 : i32
    %c0_i32_1 = arith.constant 0 : i32
    return %c0_i32, %c0_i32_0 : i32, i32
  }
  func.func @transform_3(%arg0: i32, %arg1: i32) -> (i32, i32, i32, i32) {
    %c0_i32 = arith.constant 0 : i32
    %c0_i32_0 = arith.constant 0 : i32
    %c0_i32_1 = arith.constant 0 : i32
    return %arg1, %arg0, %c0_i32, %c0_i32_0 : i32, i32, i32, i32
  }
  func.func @transform_4(%arg0: i32, %arg1: i32) -> (i32, i32, i32, i32) {
    %c0_i32 = arith.constant 0 : i32
    %c0_i32_0 = arith.constant 0 : i32
    %c0_i32_1 = arith.constant 0 : i32
    return %arg1, %arg0, %c0_i32, %c0_i32_0 : i32, i32, i32, i32
  }
}

</mosaic_0001>

<llo_original>
// kernel: tpu_custom_call.1
$region0: #{tpu_custom_call.1}
  #allocation0 [shape = 'u32[]', space=smem, size = 0x4, offset = 0x4, fixed_abs, tag = 'smem constant byte address 0x4 - core index']
  #allocation1 [shape = 'u32[72,128]{1,0:T(1,128)}', space=vmem, size = 0x9000, scoped, tag = 'internal scratch']
  %s0 = inlined_call_operand.vmem [shape: f32[2,1,18,18,4], index: 0, kind: input, shape index: {}]
  %s1 = inlined_call_operand.vmem [shape: f32[9,4,128], index: 1, kind: input, shape index: {}]
  %s2 = inlined_call_operand.vmem [shape: f32[1,128], index: 2, kind: input, shape index: {}]
  %s3 = inlined_call_operand.hbm [shape: f32[2,1,256,128], index: 3, kind: output, shape index: {0}]
  %s4 = inlined_call_operand.hbm [shape: f32[2,1,2,128], index: 4, kind: output, shape index: {1}]
  %5 = xla_tuple %s3, %s4
  %s6 = sld [smem:[#allocation0]]
  $region60: #{tpu_custom_call.1} parent=0
    _
  %s8 = ssub.s32 1, %s6
  %s9 = scalar_select 0, %s8, %s6
  $region1: #{tpu_custom_call.1} parent=0
    #allocation2 [shape = 'u8[262144]{0}', space=vmem, size = 0x40000, scoped, tag = 'output window, operand 0']
    #allocation3 [shape = 's32[2]{0}', space=sflag, size = 0x8, scoped, tag = 'scoped memory for tpu_custom_call.1']
    #allocation4 [shape = 'u8[2048]{0}', space=vmem, size = 0x800, scoped, tag = 'output window, operand 1']
    #allocation5 [shape = 's32[2]{0}', space=sflag, size = 0x8, scoped, tag = 'scoped memory for tpu_custom_call.1']
    %10 = vsyncpa [#allocation3], 0
    %s11 = scalar_lea.sflag [#allocation3], 1
    %12 = vsyncpa %s11, 0
    %13 = vsyncpa [#allocation5], 0
    %s14 = scalar_lea.sflag [#allocation5], 1
    %15 = vsyncpa %s14, 0
    loop: start=0, step=1, limit=4
    $region2: #{tpu_custom_call.1} parent=1 // loop_pre_header
      _
    $region3: #{tpu_custom_call.1} parent=1 // loop_header
      %s17 = sphi 0, %s21
      %p18 = scmp.ge.s32.totalorder %s17, 4
      %s24 = sphi 0, %s36
      %s25 = sphi 0, %s32
      %s26 = sphi 0, %s24
      %s27 = sphi 0, %s25
      %s28 = sphi 0, %s26
      %s29 = sphi 0, %s27
      %s41 = sphi 0, %s43
      %s44 = sphi 0, %s41
      %s45 = sphi 0, %s44
      %s61 = sphi 0, %s45
      %s65 = sphi 0, %s65
      %s67 = sphi 0, %s65
      %s68 = sphi 0, %s67
      %s82 = sphi 0, %s68
      %s86 = sphi 0, %s86
      %s88 = sphi 0, %s86
      %s89 = sphi 0, %s88
      %s103 = sphi 0, %s89
      %s111 = sphi 0, %s113
      %s114 = sphi 0, %s111
      %s115 = sphi 0, %s114
      %s131 = sphi 0, %s115
      %s139 = sphi 0, %s141
      %s142 = sphi 0, %s139
      %s143 = sphi 0, %s142
      %s159 = sphi 0, %s143
    $region4: #{tpu_custom_call.1} parent=1 // loop_header_branch
      %20 = sbr.rel (%p18) target = $region8
    $region5: #{tpu_custom_call.1} parent=1 // loop_body
      %s22 = ssub.s32 %s17, 1
      %s23 = ssub.s32 %s17, 2
      %s30 = sadd.s32 1, %s25
      %p31 = scmp.ge.s32.totalorder %s30, 2
      %s32 = scalar_select %p31, 0, %s30
      %s33 = sadd.s32 1, %s24
      %s34 = scalar_select %p31, %s33, %s24
      %p35 = scmp.ge.s32.totalorder %s34, 1
      %s36 = scalar_select %p35, 0, %s34
      %s37 = ssub.s32 %s25, %s32
      %s38 = ssub.s32 %s24, %s36
      %s39 = sor.u32 %s37, %s38
      %p40 = scmp.eq.s32.totalorder %s39, 0
      %s42 = sadd.s32 %s41, 1
      %s43 = scalar_select %p40, %s41, %s42
      %p46 = pneg %p40
      %p47 = scmp.eq.s32.totalorder %s17, 1
      %p48 = por %p46, %p47
      %p49 = scmp.ne.s32.totalorder %s41, %s44
      %p50 = scmp.eq.s32.totalorder %s17, 0
      %p51 = por %p49, %p50
      %p52 = scmp.ne.s32.totalorder %s41, %s44
      %p53 = scmp.eq.s32.totalorder %s22, 1
      %p54 = por %p52, %p53
      %p55 = scmp.ne.s32.totalorder %s44, %s45
      %p56 = scmp.eq.s32.totalorder %s22, 0
      %p57 = por %p55, %p56
      %p58 = scmp.ne.s32.totalorder %s44, %s45
      %p59 = scmp.eq.s32.totalorder %s23, 1
      %p60 = por %p58, %p59
      %p62 = scmp.ne.s32.totalorder %s45, %s61
      %p63 = scmp.eq.s32.totalorder %s23, 0
      %p64 = por %p62, %p63
      %s66 = sadd.s32 %s65, 1
      %p69 = scmp.eq.s32.totalorder %s17, 1
      %p70 = scmp.ne.s32.totalorder %s65, %s67
      %p71 = scmp.eq.s32.totalorder %s17, 0
      %p72 = por %p70, %p71
      %p73 = scmp.ne.s32.totalorder %s65, %s67
      %p74 = scmp.eq.s32.totalorder %s22, 1
      %p75 = por %p73, %p74
      %p76 = scmp.ne.s32.totalorder %s67, %s68
      %p77 = scmp.eq.s32.totalorder %s22, 0
      %p78 = por %p76, %p77
      %p79 = scmp.ne.s32.totalorder %s67, %s68
      %p80 = scmp.eq.s32.totalorder %s23, 1
      %p81 = por %p79, %p80
      %p83 = scmp.ne.s32.totalorder %s68, %s82
      %p84 = scmp.eq.s32.totalorder %s23, 0
      %p85 = por %p83, %p84
      %s87 = sadd.s32 %s86, 1
      %p90 = scmp.eq.s32.totalorder %s17, 1
      %p91 = scmp.ne.s32.totalorder %s86, %s88
      %p92 = scmp.eq.s32.totalorder %s17, 0
      %p93 = por %p91, %p92
      %p94 = scmp.ne.s32.totalorder %s86, %s88
      %p95 = scmp.eq.s32.totalorder %s22, 1
      %p96 = por %p94, %p95
      %p97 = scmp.ne.s32.totalorder %s88, %s89
      %p98 = scmp.eq.s32.totalorder %s22, 0
      %p99 = por %p97, %p98
      %p100 = scmp.ne.s32.totalorder %s88, %s89
      %p101 = scmp.eq.s32.totalorder %s23, 1
      %p102 = por %p100, %p101
      %p104 = scmp.ne.s32.totalorder %s89, %s103
      %p105 = scmp.eq.s32.totalorder %s23, 0
      %p106 = por %p104, %p105
      %s107 = ssub.s32 %s25, %s32
      %s108 = ssub.s32 %s24, %s36
      %s109 = sor.u32 %s107, %s108
      %p110 = scmp.eq.s32.totalorder %s109, 0
      %s112 = sadd.s32 %s111, 1
      %s113 = scalar_select %p110, %s111, %s112
      %p116 = pneg %p110
      %p117 = scmp.eq.s32.totalorder %s17, 1
      %p118 = por %p116, %p117
      %p119 = scmp.ne.s32.totalorder %s111, %s114
      %p120 = scmp.eq.s32.totalorder %s17, 0
      %p121 = por %p119, %p120
      %p122 = scmp.ne.s32.totalorder %s111, %s114
      %p123 = scmp.eq.s32.totalorder %s22, 1
      %p124 = por %p122, %p123
      %p125 = scmp.ne.s32.totalorder %s114, %s115
      %p126 = scmp.eq.s32.totalorder %s22, 0
      %p127 = por %p125, %p126
      %p128 = scmp.ne.s32.totalorder %s114, %s115
      %p129 = scmp.eq.s32.totalorder %s23, 1
      %p130 = por %p128, %p129
      %p132 = scmp.ne.s32.totalorder %s115, %s131
      %p133 = scmp.eq.s32.totalorder %s23, 0
      %p134 = por %p132, %p133
      %s135 = ssub.s32 %s25, %s32
      %s136 = ssub.s32 %s24, %s36
      %s137 = sor.u32 %s135, %s136
      %p138 = scmp.eq.s32.totalorder %s137, 0
      %s140 = sadd.s32 %s139, 1
      %s141 = scalar_select %p138, %s139, %s140
      %p144 = pneg %p138
      %p145 = scmp.eq.s32.totalorder %s17, 1
      %p146 = por %p144, %p145
      %p147 = scmp.ne.s32.totalorder %s139, %s142
      %p148 = scmp.eq.s32.totalorder %s17, 0
      %p149 = por %p147, %p148
      %p150 = scmp.ne.s32.totalorder %s139, %s142
      %p151 = scmp.eq.s32.totalorder %s22, 1
      %p152 = por %p150, %p151
      %p153 = scmp.ne.s32.totalorder %s142, %s143
      %p154 = scmp.eq.s32.totalorder %s22, 0
      %p155 = por %p153, %p154
      %p156 = scmp.ne.s32.totalorder %s142, %s143
      %p157 = scmp.eq.s32.totalorder %s23, 1
      %p158 = por %p156, %p157
      %p160 = scmp.ne.s32.totalorder %s143, %s159
      %p161 = scmp.eq.s32.totalorder %s23, 0
      %p162 = por %p160, %p161
      %p163 = scmp.le.s32.totalorder 1, %s17
      %p164 = scmp.lt.s32.totalorder %s17, 3
      %p165 = pnand %p163, %p164
      %p166 = pneg %p165
      // Predicated region
      $region9: #{tpu_custom_call.1} parent=5 // pred_check
        _
      $region10: #{tpu_custom_call.1} parent=5 // pred_check_branch
        %168 = sbr.rel (%p165) target = $region12
      $region11: #{tpu_custom_call.1} parent=5 // pred_region
        %s169 = ssub.s32 %s17, 1
        // Predicated region
        $region13: #{tpu_custom_call.1} parent=11 // pred_check
          %p170 = pneg %p78
        $region14: #{tpu_custom_call.1} parent=11 // pred_check_branch
          %172 = sbr.rel (%p170) target = $region16
        $region15: #{tpu_custom_call.1} parent=11 // pred_region
          _
        $region16: #{tpu_custom_call.1} parent=11 // pred_fallthru
          _
        // Predicated region
        $region17: #{tpu_custom_call.1} parent=11 // pred_check
          %p173 = pneg %p99
        $region18: #{tpu_custom_call.1} parent=11 // pred_check_branch
          %175 = sbr.rel (%p173) target = $region20
        $region19: #{tpu_custom_call.1} parent=11 // pred_region
          _
        $region20: #{tpu_custom_call.1} parent=11 // pred_fallthru
          _
      $region12: #{tpu_custom_call.1} parent=5 // pred_fallthru
        _
      %p176 = scmp.lt.s32.totalorder %s17, 2
      // Predicated region
      $region21: #{tpu_custom_call.1} parent=5 // pred_check
        %p177 = pneg %p176
      $region22: #{tpu_custom_call.1} parent=5 // pred_check_branch
        %179 = sbr.rel (%p177) target = $region24
      $region23: #{tpu_custom_call.1} parent=5 // pred_region
        // Predicated region
        $region25: #{tpu_custom_call.1} parent=23 // pred_check
          %p180 = pneg %p51
        $region26: #{tpu_custom_call.1} parent=23 // pred_check_branch
          %182 = sbr.rel (%p180) target = $region28
        $region27: #{tpu_custom_call.1} parent=23 // pred_region
          %p183 = scmp.lt.s32.totalorder %s25, 1
          %s184 = scalar_select %p183, %s25, 1
          %p185 = scmp.lt.s32.totalorder %s24, 0
          %s186 = scalar_select %p185, %s24, 0
          %s187 = smul.addr %s186, 54
          %s188 = smul.addr %s184, 54
          %s189 = sadd.s32 %s187, %s188
          %s190 = smul.addr %s189, 8
          %s191 = scalar_lea.vmem %s0, %s190
        $region28: #{tpu_custom_call.1} parent=23 // pred_fallthru
          _
      $region24: #{tpu_custom_call.1} parent=5 // pred_fallthru
        _
      %p192 = scmp.le.s32.totalorder 1, %s17
      %p193 = scmp.lt.s32.totalorder %s17, 3
      %p194 = pnand %p192, %p193
      %p195 = pneg %p194
      // Predicated region
      $region29: #{tpu_custom_call.1} parent=5 // pred_check
        _
      $region30: #{tpu_custom_call.1} parent=5 // pred_check_branch
        %197 = sbr.rel (%p194) target = $region32
      $region31: #{tpu_custom_call.1} parent=5 // pred_region
        %s198 = ssub.s32 %s17, 1
        %p199 = scmp.lt.s32.totalorder %s27, 1
        %s200 = scalar_select %p199, %s27, 1
        %p201 = scmp.lt.s32.totalorder %s26, 0
        %s202 = scalar_select %p201, %s26, 0
        %s203 = smul.addr %s202, 54
        %s204 = smul.addr %s200, 54
        %s205 = sadd.s32 %s203, %s204
        %s206 = smul.addr %s205, 8
        %s207 = scalar_lea.vmem %s0, %s206
        %p208 = pneg %p57
        %p209 = pneg %p54
        %p210 = pneg %p78
        %p211 = pneg %p75
        %p212 = pneg %p99
        %p213 = pneg %p96
        %p214 = pneg %p127
        %p215 = pneg %p124
        %s216 = sand.u32 %s114, 1
        %s217 = scalar_lea.sflag [#allocation3], %s216
        %s218 = sand.u32 %s114, 1
        %s219 = smul.addr %s218, 256
        %s220 = scalar_lea.vmem [#allocation2], %s219
        %p221 = pneg %p155
        %p222 = pneg %p152
        %s223 = sand.u32 %s142, 1
        %s224 = scalar_lea.sflag [#allocation5], %s223
        %s225 = sand.u32 %s142, 1
        %s226 = smul.addr %s225, 2
        %s227 = scalar_lea.vmem [#allocation4], %s226
        %p228 = scmp.lt.s32.totalorder %s27, 1
        %s229 = scalar_select %p228, %s27, 1
        %p230 = scmp.lt.s32.totalorder %s26, 0
        %s231 = scalar_select %p230, %s26, 0
        %s232 = smul.addr %s231, 54
        %s233 = smul.addr %s229, 54
        %s234 = sadd.s32 %s232, %s233
        %s235 = smul.addr %s234, 8
        %s236 = scalar_lea.vmem %s0, %s235
        loop: start=0, step=1, limit=16
        $region33: #{tpu_custom_call.1} parent=31 // loop_pre_header
          _
        $region34: #{tpu_custom_call.1} parent=31 // loop_header
          %s238 = sphi 0, %s242
          %p239 = scmp.ge.s32.totalorder %s238, 16
        $region35: #{tpu_custom_call.1} parent=31 // loop_header_branch
          %241 = sbr.rel (%p239) target = $region39
        $region36: #{tpu_custom_call.1} parent=31 // loop_body
          %s243 = smul.u32 %s238, 24
          %s244 = scalar_lea.vmem %s236, %s243
          %v245 = vld [vmem:[%s244] sm:$0xff]
          %v246 = vld [vmem:[%s244 + $0x8] sm:$0xff]
          %v247 = vld [vmem:[%s1] sm:$0xf]
          %v248 = vld [vmem:[%s244 + $0x1] sm:$0xff]
          %v249 = vld [vmem:[%s244 + $0x9] sm:$0xff]
          %s250 = scalar_lea.vmem %s1, 4
          %v251 = vld [vmem:[%s250] sm:$0xf]
          %vm252 = vcmask 31744
          %v254 = vsel %vm252, %v248, 0
          %v257 = vsel %vm252, %v249, 0
          %vm259 = vcmask 1043456
          %v261 = vsel %vm259, %v251, 0
          %263 = vmatpush.msra.mxu0 0.0
          %264 = vmatpush.msra.mxu0 0.0
          %265 = vmatpush.msra.mxu0 0.0
          %266 = vmatpush.msra.mxu0 0.0
          %267 = vmatpush.msra.mxu0 0.0
          %268 = vmatpush.msra.mxu0 0.0
          %269 = vmatpush.msra.mxu0 0.0
          %270 = vmatpush.msra.mxu0 0.0
          %271 = vmatpush.msra.mxu0 0.0
          %272 = vmatpush.msra.mxu0 0.0
          %273 = vmatpush.msra.mxu0 0.0
          %274 = vmatpush.msra.mxu0 0.0
          %275 = vmatpush.msra.mxu0 0.0
          %276 = vmatpush.msra.mxu0 0.0
          %277 = vmatpush.msra.mxu0 0.0
          %278 = vmatpush.msra.mxu0 %v261
          %279 = vmatmul.f32.gmra.mxu0 %v254
          %v280 = vpop.f32.mrf.mxu0
          %v281 = vadd.f32 0.0, %v280
          %282 = vmatmul.f32.gmra.mxu0 %v257
          %v283 = vpop.f32.mrf.mxu0
          %v284 = vadd.f32 0.0, %v283
          %285 = vdwg.mxu0
          %v287 = vsel %vm252, %v245, 0
          %v290 = vsel %vm252, %v246, 0
          %v293 = vsel %vm259, %v247, 0
          %295 = vmatpush.msra.mxu0 0.0
          %296 = vmatpush.msra.mxu0 0.0
          %297 = vmatpush.msra.mxu0 0.0
          %298 = vmatpush.msra.mxu0 0.0
          %299 = vmatpush.msra.mxu0 0.0
          %300 = vmatpush.msra.mxu0 0.0
          %301 = vmatpush.msra.mxu0 0.0
          %302 = vmatpush.msra.mxu0 0.0
          %303 = vmatpush.msra.mxu0 0.0
          %304 = vmatpush.msra.mxu0 0.0
          %305 = vmatpush.msra.mxu0 0.0
          %306 = vmatpush.msra.mxu0 0.0
          %307 = vmatpush.msra.mxu0 0.0
          %308 = vmatpush.msra.mxu0 0.0
          %309 = vmatpush.msra.mxu0 0.0
          %310 = vmatpush.msra.mxu0 %v293
          %311 = vmatmul.f32.gmra.mxu0 %v287
          %v312 = vpop.f32.mrf.mxu0
          %v313 = vadd.f32 %v281, %v312
          %314 = vmatmul.f32.gmra.mxu0 %v290
          %v315 = vpop.f32.mrf.mxu0
          %v316 = vadd.f32 %v284, %v315
          %317 = vdwg.mxu0
          %v318 = vld [vmem:[%s244 + $0x2] sm:$0xff]
          %v319 = vld [vmem:[%s244 + $0xa] sm:$0xff]
          %s320 = scalar_lea.vmem %s1, 8
          %v321 = vld [vmem:[%s320] sm:$0xf]
          %v323 = vsel %vm252, %v318, 0
          %v326 = vsel %vm252, %v319, 0
          %v329 = vsel %vm259, %v321, 0
          %331 = vmatpush.msra.mxu0 0.0
          %332 = vmatpush.msra.mxu0 0.0
          %333 = vmatpush.msra.mxu0 0.0
          %334 = vmatpush.msra.mxu0 0.0
          %335 = vmatpush.msra.mxu0 0.0
          %336 = vmatpush.msra.mxu0 0.0
          %337 = vmatpush.msra.mxu0 0.0
          %338 = vmatpush.msra.mxu0 0.0
          %339 = vmatpush.msra.mxu0 0.0
          %340 = vmatpush.msra.mxu0 0.0
          %341 = vmatpush.msra.mxu0 0.0
          %342 = vmatpush.msra.mxu0 0.0
          %343 = vmatpush.msra.mxu0 0.0
          %344 = vmatpush.msra.mxu0 0.0
          %345 = vmatpush.msra.mxu0 0.0
          %346 = vmatpush.msra.mxu0 %v329
          %347 = vmatmul.f32.gmra.mxu0 %v323
          %v348 = vpop.f32.mrf.mxu0
          %v349 = vadd.f32 0.0, %v348
          %350 = vmatmul.f32.gmra.mxu0 %v326
          %v351 = vpop.f32.mrf.mxu0
          %v352 = vadd.f32 0.0, %v351
          %353 = vdwg.mxu0
          %v354 = vadd.f32 %v313, %v349
          %v355 = vadd.f32 %v316, %v352
          %s356 = sadd.s32 %s238, 1
          %s357 = smul.u32 %s356, 24
          %s358 = scalar_lea.vmem %s236, %s357
          %v359 = vld [vmem:[%s358] sm:$0xff]
          %v360 = vld [vmem:[%s358 + $0x8] sm:$0xff]
          %s361 = scalar_lea.vmem %s1, 12
          %v362 = vld [vmem:[%s361] sm:$0xf]
          %v364 = vsel %vm252, %v359, 0
          %v367 = vsel %vm252, %v360, 0
          %v370 = vsel %vm259, %v362, 0
          %372 = vmatpush.msra.mxu0 0.0
          %373 = vmatpush.msra.mxu0 0.0
          %374 = vmatpush.msra.mxu0 0.0
          %375 = vmatpush.msra.mxu0 0.0
          %376 = vmatpush.msra.mxu0 0.0
          %377 = vmatpush.msra.mxu0 0.0
          %378 = vmatpush.msra.mxu0 0.0
          %379 = vmatpush.msra.mxu0 0.0
          %380 = vmatpush.msra.mxu0 0.0
          %381 = vmatpush.msra.mxu0 0.0
          %382 = vmatpush.msra.mxu0 0.0
          %383 = vmatpush.msra.mxu0 0.0
          %384 = vmatpush.msra.mxu0 0.0
          %385 = vmatpush.msra.mxu0 0.0
          %386 = vmatpush.msra.mxu0 0.0
          %387 = vmatpush.msra.mxu0 %v370
          %388 = vmatmul.f32.gmra.mxu0 %v364
          %v389 = vpop.f32.mrf.mxu0
          %v390 = vadd.f32 0.0, %v389
          %391 = vmatmul.f32.gmra.mxu0 %v367
          %v392 = vpop.f32.mrf.mxu0
          %v393 = vadd.f32 0.0, %v392
          %394 = vdwg.mxu0
          %v395 = vadd.f32 %v354, %v390
          %v396 = vadd.f32 %v355, %v393
          %v397 = vld [vmem:[%s358 + $0x1] sm:$0xff]
          %v398 = vld [vmem:[%s358 + $0x9] sm:$0xff]
          %s399 = scalar_lea.vmem %s1, 16
          %v400 = vld [vmem:[%s399] sm:$0xf]
          %v402 = vsel %vm252, %v397, 0
          %v405 = vsel %vm252, %v398, 0
          %v408 = vsel %vm259, %v400, 0
          %410 = vmatpush.msra.mxu0 0.0
          %411 = vmatpush.msra.mxu0 0.0
          %412 = vmatpush.msra.mxu0 0.0
          %413 = vmatpush.msra.mxu0 0.0
          %414 = vmatpush.msra.mxu0 0.0
          %415 = vmatpush.msra.mxu0 0.0
          %416 = vmatpush.msra.mxu0 0.0
          %417 = vmatpush.msra.mxu0 0.0
          %418 = vmatpush.msra.mxu0 0.0
          %419 = vmatpush.msra.mxu0 0.0
          %420 = vmatpush.msra.mxu0 0.0
          %421 = vmatpush.msra.mxu0 0.0
          %422 = vmatpush.msra.mxu0 0.0
          %423 = vmatpush.msra.mxu0 0.0
          %424 = vmatpush.msra.mxu0 0.0
          %425 = vmatpush.msra.mxu0 %v408
          %426 = vmatmul.f32.gmra.mxu0 %v402
          %v427 = vpop.f32.mrf.mxu0
          %v428 = vadd.f32 0.0, %v427
          %429 = vmatmul.f32.gmra.mxu0 %v405
          %v430 = vpop.f32.mrf.mxu0
          %v431 = vadd.f32 0.0, %v430
          %432 = vdwg.mxu0
          %v433 = vadd.f32 %v395, %v428
          %v434 = vadd.f32 %v396, %v431
          %v435 = vld [vmem:[%s358 + $0x2] sm:$0xff]
          %v436 = vld [vmem:[%s358 + $0xa] sm:$0xff]
          %s437 = scalar_lea.vmem %s1, 20
          %v438 = vld [vmem:[%s437] sm:$0xf]
          %v440 = vsel %vm252, %v435, 0
          %v443 = vsel %vm252, %v436, 0
          %v446 = vsel %vm259, %v438, 0
          %448 = vmatpush.msra.mxu0 0.0
          %449 = vmatpush.msra.mxu0 0.0
          %450 = vmatpush.msra.mxu0 0.0
          %451 = vmatpush.msra.mxu0 0.0
          %452 = vmatpush.msra.mxu0 0.0
          %453 = vmatpush.msra.mxu0 0.0
          %454 = vmatpush.msra.mxu0 0.0
          %455 = vmatpush.msra.mxu0 0.0
          %456 = vmatpush.msra.mxu0 0.0
          %457 = vmatpush.msra.mxu0 0.0
          %458 = vmatpush.msra.mxu0 0.0
          %459 = vmatpush.msra.mxu0 0.0
          %460 = vmatpush.msra.mxu0 0.0
          %461 = vmatpush.msra.mxu0 0.0
          %462 = vmatpush.msra.mxu0 0.0
          %463 = vmatpush.msra.mxu0 %v446
          %464 = vmatmul.f32.gmra.mxu0 %v440
          %v465 = vpop.f32.mrf.mxu0
          %v466 = vadd.f32 0.0, %v465
          %467 = vmatmul.f32.gmra.mxu0 %v443
          %v468 = vpop.f32.mrf.mxu0
          %v469 = vadd.f32 0.0, %v468
          %470 = vdwg.mxu0
          %v471 = vadd.f32 %v433, %v466
          %v472 = vadd.f32 %v434, %v469
          %s473 = sadd.s32 %s238, 2
          %s474 = smul.u32 %s473, 24
          %s475 = scalar_lea.vmem %s236, %s474
          %v476 = vld [vmem:[%s475] sm:$0xff]
          %v477 = vld [vmem:[%s475 + $0x8] sm:$0xff]
          %s478 = scalar_lea.vmem %s1, 24
          %v479 = vld [vmem:[%s478] sm:$0xf]
          %v481 = vsel %vm252, %v476, 0
          %v484 = vsel %vm252, %v477, 0
          %v487 = vsel %vm259, %v479, 0
          %489 = vmatpush.msra.mxu0 0.0
          %490 = vmatpush.msra.mxu0 0.0
          %491 = vmatpush.msra.mxu0 0.0
          %492 = vmatpush.msra.mxu0 0.0
          %493 = vmatpush.msra.mxu0 0.0
          %494 = vmatpush.msra.mxu0 0.0
          %495 = vmatpush.msra.mxu0 0.0
          %496 = vmatpush.msra.mxu0 0.0
          %497 = vmatpush.msra.mxu0 0.0
          %498 = vmatpush.msra.mxu0 0.0
          %499 = vmatpush.msra.mxu0 0.0
          %500 = vmatpush.msra.mxu0 0.0
          %501 = vmatpush.msra.mxu0 0.0
          %502 = vmatpush.msra.mxu0 0.0
          %503 = vmatpush.msra.mxu0 0.0
          %504 = vmatpush.msra.mxu0 %v487
          %505 = vmatmul.f32.gmra.mxu0 %v481
          %v506 = vpop.f32.mrf.mxu0
          %v507 = vadd.f32 0.0, %v506
          %508 = vmatmul.f32.gmra.mxu0 %v484
          %v509 = vpop.f32.mrf.mxu0
          %v510 = vadd.f32 0.0, %v509
          %511 = vdwg.mxu0
          %v512 = vadd.f32 %v471, %v507
          %v513 = vadd.f32 %v472, %v510
          %v514 = vld [vmem:[%s475 + $0x1] sm:$0xff]
          %v515 = vld [vmem:[%s475 + $0x9] sm:$0xff]
          %s516 = scalar_lea.vmem %s1, 28
          %v517 = vld [vmem:[%s516] sm:$0xf]
          %v519 = vsel %vm252, %v514, 0
          %v522 = vsel %vm252, %v515, 0
          %v525 = vsel %vm259, %v517, 0
          %527 = vmatpush.msra.mxu0 0.0
          %528 = vmatpush.msra.mxu0 0.0
          %529 = vmatpush.msra.mxu0 0.0
          %530 = vmatpush.msra.mxu0 0.0
          %531 = vmatpush.msra.mxu0 0.0
          %532 = vmatpush.msra.mxu0 0.0
          %533 = vmatpush.msra.mxu0 0.0
          %534 = vmatpush.msra.mxu0 0.0
          %535 = vmatpush.msra.mxu0 0.0
          %536 = vmatpush.msra.mxu0 0.0
          %537 = vmatpush.msra.mxu0 0.0
          %538 = vmatpush.msra.mxu0 0.0
          %539 = vmatpush.msra.mxu0 0.0
          %540 = vmatpush.msra.mxu0 0.0
          %541 = vmatpush.msra.mxu0 0.0
          %542 = vmatpush.msra.mxu0 %v525
          %543 = vmatmul.f32.gmra.mxu0 %v519
          %v544 = vpop.f32.mrf.mxu0
          %v545 = vadd.f32 0.0, %v544
          %546 = vmatmul.f32.gmra.mxu0 %v522
          %v547 = vpop.f32.mrf.mxu0
          %v548 = vadd.f32 0.0, %v547
          %549 = vdwg.mxu0
          %v550 = vadd.f32 %v512, %v545
          %v551 = vadd.f32 %v513, %v548
          %v552 = vld [vmem:[%s475 + $0x2] sm:$0xff]
          %v553 = vld [vmem:[%s475 + $0xa] sm:$0xff]
          %s554 = scalar_lea.vmem %s1, 32
          %v555 = vld [vmem:[%s554] sm:$0xf]
          %v557 = vsel %vm252, %v552, 0
          %v560 = vsel %vm252, %v553, 0
          %v563 = vsel %vm259, %v555, 0
          %565 = vmatpush.msra.mxu0 0.0
          %566 = vmatpush.msra.mxu0 0.0
          %567 = vmatpush.msra.mxu0 0.0
          %568 = vmatpush.msra.mxu0 0.0
          %569 = vmatpush.msra.mxu0 0.0
          %570 = vmatpush.msra.mxu0 0.0
          %571 = vmatpush.msra.mxu0 0.0
          %572 = vmatpush.msra.mxu0 0.0
          %573 = vmatpush.msra.mxu0 0.0
          %574 = vmatpush.msra.mxu0 0.0
          %575 = vmatpush.msra.mxu0 0.0
          %576 = vmatpush.msra.mxu0 0.0
          %577 = vmatpush.msra.mxu0 0.0
          %578 = vmatpush.msra.mxu0 0.0
          %579 = vmatpush.msra.mxu0 0.0
          %580 = vmatpush.msra.mxu0 %v563
          %581 = vmatmul.f32.gmra.mxu0 %v557
          %v582 = vpop.f32.mrf.mxu0
          %v583 = vadd.f32 0.0, %v582
          %584 = vmatmul.f32.gmra.mxu0 %v560
          %v585 = vpop.f32.mrf.mxu0
          %v586 = vadd.f32 0.0, %v585
          %587 = vdwg.mxu0
          %v588 = vadd.f32 %v550, %v583
          %v589 = vadd.f32 %v551, %v586
          %v590 = vld [vmem:[%s2] sm:$0x1]
          %v592 = vperm.slane %v590, 0
          %v594 = vadd.f32 %v588, %v592
          %v595 = vadd.f32 %v589, %v592
          %s596 = smul.u32 %s238, 16
          %s597 = scalar_lea.vmem %s220, %s596 [#allocation2]
          %598 = vst [vmem:[%s597] sm:$0xff] %v594
          %599 = vst [vmem:[%s597 + $0x8] sm:$0xff] %v595
        $region37: #{tpu_custom_call.1} parent=31 // loop_footer
          %s242 = sadd.s32 1, %s238
        $region38: #{tpu_custom_call.1} parent=31 // loop_footer_branch
          %237 = sbr.rel target = $region34
        $region39: #{tpu_custom_call.1} parent=31 // loop_exit
          _
        %v600 = vld [vmem:[%s220] sm:$0xff]
        %v601 = vld [vmem:[%s220 + $0x8] sm:$0xff]
        %v602 = vld [vmem:[%s220 + $0x10] sm:$0xff]
        %v603 = vld [vmem:[%s220 + $0x18] sm:$0xff]
        %v604 = vld [vmem:[%s220 + $0x20] sm:$0xff]
        %v605 = vld [vmem:[%s220 + $0x28] sm:$0xff]
        %v606 = vld [vmem:[%s220 + $0x30] sm:$0xff]
        %v607 = vld [vmem:[%s220 + $0x38] sm:$0xff]
        %v608 = vld [vmem:[%s220 + $0x40] sm:$0xff]
        %v609 = vld [vmem:[%s220 + $0x48] sm:$0xff]
        %v610 = vld [vmem:[%s220 + $0x50] sm:$0xff]
        %v611 = vld [vmem:[%s220 + $0x58] sm:$0xff]
        %v612 = vld [vmem:[%s220 + $0x60] sm:$0xff]
        %v613 = vld [vmem:[%s220 + $0x68] sm:$0xff]
        %v614 = vld [vmem:[%s220 + $0x70] sm:$0xff]
        %v615 = vld [vmem:[%s220 + $0x78] sm:$0xff]
        %v616 = vld [vmem:[%s220 + $0x80] sm:$0xff]
        %v617 = vld [vmem:[%s220 + $0x88] sm:$0xff]
        %v618 = vld [vmem:[%s220 + $0x90] sm:$0xff]
        %v619 = vld [vmem:[%s220 + $0x98] sm:$0xff]
        %v620 = vld [vmem:[%s220 + $0xa0] sm:$0xff]
        %v621 = vld [vmem:[%s220 + $0xa8] sm:$0xff]
        %v622 = vld [vmem:[%s220 + $0xb0] sm:$0xff]
        %v623 = vld [vmem:[%s220 + $0xb8] sm:$0xff]
        %v624 = vld [vmem:[%s220 + $0xc0] sm:$0xff]
        %v625 = vld [vmem:[%s220 + $0xc8] sm:$0xff]
        %v626 = vld [vmem:[%s220 + $0xd0] sm:$0xff]
        %v627 = vld [vmem:[%s220 + $0xd8] sm:$0xff]
        %v628 = vld [vmem:[%s220 + $0xe0] sm:$0xff]
        %v629 = vld [vmem:[%s220 + $0xe8] sm:$0xff]
        %v630 = vld [vmem:[%s220 + $0xf0] sm:$0xff]
        %v631 = vld [vmem:[%s220 + $0xf8] sm:$0xff]
        %v632 = vadd.f32 %v600, %v601
        %v633 = vadd.f32 %v632, %v602
        %v634 = vadd.f32 %v633, %v603
        %v635 = vadd.f32 %v634, %v604
        %v636 = vadd.f32 %v635, %v605
        %v637 = vadd.f32 %v636, %v606
        %v638 = vadd.f32 %v637, %v607
        %v639 = vadd.f32 %v638, %v608
        %v640 = vadd.f32 %v639, %v609
        %v641 = vadd.f32 %v640, %v610
        %v642 = vadd.f32 %v641, %v611
        %v643 = vadd.f32 %v642, %v612
        %v644 = vadd.f32 %v643, %v613
        %v645 = vadd.f32 %v644, %v614
        %v646 = vadd.f32 %v645, %v615
        %v647 = vadd.f32 %v646, %v616
        %v648 = vadd.f32 %v647, %v617
        %v649 = vadd.f32 %v648, %v618
        %v650 = vadd.f32 %v649, %v619
        %v651 = vadd.f32 %v650, %v620
        %v652 = vadd.f32 %v651, %v621
        %v653 = vadd.f32 %v652, %v622
        %v654 = vadd.f32 %v653, %v623
        %v655 = vadd.f32 %v654, %v624
        %v656 = vadd.f32 %v655, %v625
        %v657 = vadd.f32 %v656, %v626
        %v658 = vadd.f32 %v657, %v627
        %v659 = vadd.f32 %v658, %v628
        %v660 = vadd.f32 %v659, %v629
        %v661 = vadd.f32 %v660, %v630
        %v662 = vadd.f32 %v661, %v631
        %v663 = vrot.slane %v662, 4
        %v664 = vadd.f32 %v662, %v663
        %v665 = vrot.slane %v664, 2
        %v666 = vadd.f32 %v664, %v665
        %v667 = vrot.slane %v666, 1
        %v668 = vadd.f32 %v666, %v667
        %669 = vst [vmem:[%s227] sm:$0x1] %v668
        %v670 = vmul.f32 %v600, %v600
        %v671 = vmul.f32 %v601, %v601
        %v672 = vmul.f32 %v602, %v602
        %v673 = vmul.f32 %v603, %v603
        %v674 = vmul.f32 %v604, %v604
        %v675 = vmul.f32 %v605, %v605
        %v676 = vmul.f32 %v606, %v606
        %v677 = vmul.f32 %v607, %v607
        %v678 = vmul.f32 %v608, %v608
        %v679 = vmul.f32 %v609, %v609
        %v680 = vmul.f32 %v610, %v610
        %v681 = vmul.f32 %v611, %v611
        %v682 = vmul.f32 %v612, %v612
        %v683 = vmul.f32 %v613, %v613
        %v684 = vmul.f32 %v614, %v614
        %v685 = vmul.f32 %v615, %v615
        %v686 = vmul.f32 %v616, %v616
        %v687 = vmul.f32 %v617, %v617
        %v688 = vmul.f32 %v618, %v618
        %v689 = vmul.f32 %v619, %v619
        %v690 = vmul.f32 %v620, %v620
        %v691 = vmul.f32 %v621, %v621
        %v692 = vmul.f32 %v622, %v622
        %v693 = vmul.f32 %v623, %v623
        %v694 = vmul.f32 %v624, %v624
        %v695 = vmul.f32 %v625, %v625
        %v696 = vmul.f32 %v626, %v626
        %v697 = vmul.f32 %v627, %v627
        %v698 = vmul.f32 %v628, %v628
        %v699 = vmul.f32 %v629, %v629
        %v700 = vmul.f32 %v630, %v630
        %v701 = vmul.f32 %v631, %v631
        %v702 = vadd.f32 %v670, %v671
        %v703 = vadd.f32 %v702, %v672
        %v704 = vadd.f32 %v703, %v673
        %v705 = vadd.f32 %v704, %v674
        %v706 = vadd.f32 %v705, %v675
        %v707 = vadd.f32 %v706, %v676
        %v708 = vadd.f32 %v707, %v677
        %v709 = vadd.f32 %v708, %v678
        %v710 = vadd.f32 %v709, %v679
        %v711 = vadd.f32 %v710, %v680
        %v712 = vadd.f32 %v711, %v681
        %v713 = vadd.f32 %v712, %v682
        %v714 = vadd.f32 %v713, %v683
        %v715 = vadd.f32 %v714, %v684
        %v716 = vadd.f32 %v715, %v685
        %v717 = vadd.f32 %v716, %v686
        %v718 = vadd.f32 %v717, %v687
        %v719 = vadd.f32 %v718, %v688
        %v720 = vadd.f32 %v719, %v689
        %v721 = vadd.f32 %v720, %v690
        %v722 = vadd.f32 %v721, %v691
        %v723 = vadd.f32 %v722, %v692
        %v724 = vadd.f32 %v723, %v693
        %v725 = vadd.f32 %v724, %v694
        %v726 = vadd.f32 %v725, %v695
        %v727 = vadd.f32 %v726, %v696
        %v728 = vadd.f32 %v727, %v697
        %v729 = vadd.f32 %v728, %v698
        %v730 = vadd.f32 %v729, %v699
        %v731 = vadd.f32 %v730, %v700
        %v732 = vadd.f32 %v731, %v701
        %v733 = vrot.slane %v732, 4
        %v734 = vadd.f32 %v732, %v733
        %v735 = vrot.slane %v734, 2
        %v736 = vadd.f32 %v734, %v735
        %v737 = vrot.slane %v736, 1
        %v738 = vadd.f32 %v736, %v737
        %739 = vst [vmem:[%s227 + $0x1] sm:$0x1] %v738
        %s740 = sand.u32 %s114, 1
        %s741 = scalar_lea.sflag [#allocation3], %s740
        %s742 = sand.u32 %s114, 1
        %s743 = smul.addr %s742, 256
        %s744 = scalar_lea.vmem [#allocation2], %s743
        %s745 = sand.u32 %s142, 1
        %s746 = scalar_lea.sflag [#allocation5], %s745
        %s747 = sand.u32 %s142, 1
        %s748 = smul.addr %s747, 2
        %s749 = scalar_lea.vmem [#allocation4], %s748
        // Predicated region
        $region40: #{tpu_custom_call.1} parent=31 // pred_check
          %p750 = pneg %p124
        $region41: #{tpu_custom_call.1} parent=31 // pred_check_branch
          %752 = sbr.rel (%p750) target = $region43
        $region42: #{tpu_custom_call.1} parent=31 // pred_region
          %754 = vsyncadd %s741, 0
          %s755 = smul.addr %s26, 32
          %s756 = smul.addr %s27, 32
          %s757 = sadd.s32 %s755, %s756
          %s758 = smul.addr %s757, 8
          %s759 = scalar_lea.hbm %s3, %s758
          %s760 = sshll.u32 %s744, 4
          %s761 = int_to_ptr.vmem [resolvable:$true] %s760
          %s762 = sshll.u32 %s759, 4
          %s763 = int_to_ptr.hbm [resolvable:$true] %s762
          %768 = dma.vmem_to_hbm [thread:$0]  %s761, 4096, %s763, %s741, 128, 128, 8
        $region43: #{tpu_custom_call.1} parent=31 // pred_fallthru
          _
        // Predicated region
        $region44: #{tpu_custom_call.1} parent=31 // pred_check
          %p769 = pneg %p152
        $region45: #{tpu_custom_call.1} parent=31 // pred_check_branch
          %771 = sbr.rel (%p769) target = $region47
        $region46: #{tpu_custom_call.1} parent=31 // pred_region
          %773 = vsyncadd %s746, 0
          %s774 = sadd.s32 %s26, %s27
          %s775 = smul.addr %s774, 2
          %s776 = scalar_lea.hbm %s4, %s775
          %s778 = sshll.u32 %s749, 4
          %s779 = int_to_ptr.vmem [resolvable:$true] %s778
          %s780 = sshll.u32 %s776, 4
          %s781 = int_to_ptr.hbm [resolvable:$true] %s780
          %783 = dma.vmem_to_hbm [thread:$0]  %s779, 32, %s781, %s746
        $region47: #{tpu_custom_call.1} parent=31 // pred_fallthru
          _
      $region32: #{tpu_custom_call.1} parent=5 // pred_fallthru
        _
      %p784 = scmp.le.s32.totalorder 2, %s17
      // Predicated region
      $region48: #{tpu_custom_call.1} parent=5 // pred_check
        %p785 = pneg %p784
      $region49: #{tpu_custom_call.1} parent=5 // pred_check_branch
        %787 = sbr.rel (%p785) target = $region51
      $region50: #{tpu_custom_call.1} parent=5 // pred_region
        %s788 = ssub.s32 %s17, 2
        // Predicated region
        $region52: #{tpu_custom_call.1} parent=50 // pred_check
          %p789 = pneg %p130
        $region53: #{tpu_custom_call.1} parent=50 // pred_check_branch
          %791 = sbr.rel (%p789) target = $region55
        $region54: #{tpu_custom_call.1} parent=50 // pred_region
          %s792 = sand.u32 %s115, 1
          %s793 = scalar_lea.sflag [#allocation3], %s792
          %s794 = sand.u32 %s115, 1
          %s795 = smul.addr %s794, 256
          %s796 = scalar_lea.vmem [#allocation2], %s795
          %798 = dma.done %s793, 4096
        $region55: #{tpu_custom_call.1} parent=50 // pred_fallthru
          _
        // Predicated region
        $region56: #{tpu_custom_call.1} parent=50 // pred_check
          %p799 = pneg %p158
        $region57: #{tpu_custom_call.1} parent=50 // pred_check_branch
          %801 = sbr.rel (%p799) target = $region59
        $region58: #{tpu_custom_call.1} parent=50 // pred_region
          %s802 = sand.u32 %s143, 1
          %s803 = scalar_lea.sflag [#allocation5], %s802
          %s804 = sand.u32 %s143, 1
          %s805 = smul.addr %s804, 2
          %s806 = scalar_lea.vmem [#allocation4], %s805
          %808 = dma.done %s803, 32
        $region59: #{tpu_custom_call.1} parent=50 // pred_fallthru
          _
      $region51: #{tpu_custom_call.1} parent=5 // pred_fallthru
        _
    $region6: #{tpu_custom_call.1} parent=1 // loop_footer
      %s21 = sadd.s32 1, %s17
    $region7: #{tpu_custom_call.1} parent=1 // loop_footer_branch
      %16 = sbr.rel target = $region3
    $region8: #{tpu_custom_call.1} parent=1 // loop_exit
      _
    %809 = vsyncpa [#allocation3], 1
    %s810 = scalar_lea.sflag [#allocation3], 1
    %811 = vsyncpa %s810, 1
    %812 = vsyncpa [#allocation5], 1
    %s813 = scalar_lea.sflag [#allocation5], 1
    %814 = vsyncpa %s813, 1

</llo_original>
